<compile_context>
chip_gen: v7x
topology: tpu7x:2x2x1
jax: 0.10.0
libtpu: 0.0.40
codegen_flags: <defaults>
</compile_context>

<pallas_src>
import math

import jax
import jax.numpy as jnp
from jax.experimental import pallas as pl
from jax.experimental.pallas import tpu as pltpu


def _bias_add_kernel(x_ref, b_ref, o_ref):
    # x_ref: (TR, TC) tile; b_ref: (TR, 1) column or (1, TC) row -> VPU broadcast add.
    o_ref[...] = x_ref[...] + b_ref[...]


def _round_up(v, m):
    return ((v + m - 1) // m) * m


def _round_down(v, m):
    return (v // m) * m


def _sublane_pack(itemsize):
    # Rows per packed sublane tile: f32 -> 8, bf16/f16 -> 16, int8/fp8 -> 32.
    return max(8, 32 // max(1, itemsize))


def _vmem_limit_bytes():
    # Generation-aware VMEM ceiling with headroom under physical capacity.
    phys = 64 << 20
    try:
        info = pltpu.get_tpu_info()
        phys = int(getattr(info, "vmem_capacity_bytes", phys) or phys)
    except Exception:
        pass
    return max(32 << 20, min(phys * 3 // 4, 96 << 20))


def _choose_tiles(rows, cols, itemsize, pack, bias_is_row, vmem_limit):
    """Byte-budgeted (TR, TC) tiles for a (rows, cols) streaming add."""
    lane_cols = _round_up(cols, 128)
    total_bytes = rows * lane_cols * itemsize

    # Guarantee several grid steps once there is enough data to pipeline DMA against compute
    # (and give both v7x TensorCores balanced work), without shrinking tiles so far that the
    # fixed ~0.35us/step overhead dominates.
    if total_bytes >= (32 << 20):
        min_steps = 8
    elif total_bytes >= (4 << 20):
        min_steps = 4
    elif total_bytes >= (1 << 20):
        min_steps = 2
    else:
        min_steps = 1

    budget = int(vmem_limit * 0.8)  # double-buffered x + out + lane-padded bias must fit
    target = max(256 << 10, min(8 << 20, total_bytes // min_steps))  # x-tile bytes per step

    row_bytes = lane_cols * itemsize
    # Per-step bytes per row of TR at full lane width: 2 bufs * (x + out [+ bias column lanes]).
    per_row_step = 2 * itemsize * (2 * lane_cols + (0 if bias_is_row else 128))
    step_fixed = (2 * pack * lane_cols * itemsize) if bias_is_row else 0  # resident (1, cols) bias row

    if pack * per_row_step + step_fixed <= budget:
        # Row-tiled, full lane width (lane-dense, unmasked stores).
        tc = cols
        tr_cap = max(pack, (budget - step_fixed) // per_row_step)
        tr = min(rows, max(pack, target // row_bytes), tr_cap)
        tr = rows if tr >= rows else max(pack, _round_down(tr, pack))
    else:
        # Rows too wide for VMEM even at one packed sublane group: tile the lane axis too.
        tr = min(rows, max(pack, _round_down(min(rows, 64), pack)))
        ptr = _round_up(tr, pack)
        per_col_step = 2 * itemsize * (2 * ptr + (pack if bias_is_row else 0))
        tc_cap = max(128, budget // per_col_step)
        tc = min(cols, max(128, target // (ptr * itemsize)), tc_cap)
        tc = cols if tc >= cols else max(128, _round_down(tc, 128))
    return tr, tc


def _bias_add_2d(x2, b2, *, bias_is_row, donate_x=False, tiles=None):
    rows, cols = x2.shape
    itemsize = jnp.dtype(x2.dtype).itemsize
    pack = _sublane_pack(itemsize)
    vmem_limit = _vmem_limit_bytes()

    tr, tc = _choose_tiles(rows, cols, itemsize, pack, bias_is_row, vmem_limit) \
        if tiles is None else tiles

    grid = (pl.cdiv(rows, tr), pl.cdiv(cols, tc))

    if bias_is_row:
        b_spec = pl.BlockSpec((1, tc), lambda i, j: (0, j))   # lane-major bias row
    else:
        b_spec = pl.BlockSpec((tr, 1), lambda i, j: (i, 0))   # per-row bias column

    kwargs = {}
    if donate_x:
        # No bandwidth change, but halves peak HBM footprint when the caller can donate x.
        kwargs["input_output_aliases"] = {0: 0}

    return pl.pallas_call(
        _bias_add_kernel,
        out_shape=jax.ShapeDtypeStruct((rows, cols), x2.dtype),
        grid=grid,
        in_specs=[
            pl.BlockSpec((tr, tc), lambda i, j: (i, j)),
            b_spec,
        ],
        out_specs=pl.BlockSpec((tr, tc), lambda i, j: (i, j)),
        compiler_params=pltpu.CompilerParams(
            dimension_semantics=("parallel", "parallel"),  # independent tiles -> megacore sharding
            vmem_limit_bytes=vmem_limit,
        ),
        **kwargs,
    )(x2, b2)


def bias_forward(x, bias, *, donate_x=False):
    """forward(x) = x + bias with PyTorch right-aligned broadcasting."""
    x = jnp.asarray(x)
    b = jnp.asarray(bias, dtype=x.dtype)

    # Right-align bias against x; strip leading size-1 dims (they only broadcast).
    bshape = tuple(b.shape)
    while bshape and bshape[0] == 1:
        bshape = bshape[1:]
    if not bshape:                                   # scalar bias -> broadcast over the last dim
        bshape = (1,)
    b = b.reshape(bshape)
    k = len(bshape)
    assert k <= x.ndim, "bias has more (non-singleton) dims than the input"
    lead, trail = x.shape[: x.ndim - k], x.shape[x.ndim - k:]
    for bd, xd in zip(bshape, trail):
        assert bd in (1, xd), f"bias shape {bias.shape} not broadcastable to input {x.shape}"

    lead_sz = math.prod(lead) if lead else 1
    spatial_sz = math.prod(trail[1:]) if len(trail) > 1 else 1

    per_channel = bshape[0] == trail[0] and all(d == 1 for d in bshape[1:])
    lane_dense_spatial = spatial_sz >= 128 and spatial_sz % 128 == 0

    if per_channel and lane_dense_spatial and lead_sz * trail[0] >= 8:
        # Conv-style per-channel bias with a lane-dense spatial extent:
        # rows = N*C (tiled, parallel), cols = H*W (full lane width), bias as a (rows, 1) column.
        rows, cols = lead_sz * trail[0], spatial_sz
        x2 = x.reshape(rows, cols)
        b2 = jnp.broadcast_to(b.reshape(1, trail[0]), (lead_sz, trail[0])).reshape(rows, 1)
        out2 = _bias_add_2d(x2, b2, bias_is_row=False, donate_x=donate_x)
    else:
        # Lane-density fallback / general right-aligned broadcast: rows = prod(lead),
        # cols = prod(trail); bias is materialized once over the trailing dims and fed as a
        # lane-major (1, cols) row.
        rows, cols = lead_sz, math.prod(trail)
        x2 = x.reshape(rows, cols)
        b2 = jnp.broadcast_to(b, trail).reshape(1, cols)
        out2 = _bias_add_2d(x2, b2, bias_is_row=True, donate_x=donate_x)

    return out2.reshape(x.shape)


if __name__ == "__main__":
    key = jax.random.PRNGKey(0)
    kx, kb, kx2, kb2, kx3, kb3 = jax.random.split(key, 6)

    # Primary case: NCHW input with a per-channel (C, 1, 1) bias (column-bias layout).
    N, C, H, W = 2, 4, 16, 16
    x = jax.random.normal(kx, (N, C, H, W), dtype=jnp.float32)
    bias = jax.random.normal(kb, (C, 1, 1), dtype=jnp.float32)
    out = jax.block_until_ready(bias_forward(x, bias))
    assert out.shape == x.shape
    assert jnp.allclose(out, x + bias, atol=1e-6, rtol=1e-6), "mismatch (per-channel NCHW)"

    # Lane-density fallback: H*W = 49 is not 128-aligned -> (N, C*H*W) layout with a resident bias row.
    x2 = jax.random.normal(kx2, (3, 5, 7, 7), dtype=jnp.float32)
    b2 = jax.random.normal(kb2, (5, 1, 1), dtype=jnp.float32)
    out2 = jax.block_until_ready(bias_forward(x2, b2))
    assert jnp.allclose(out2, x2 + b2, atol=1e-6, rtol=1e-6), "mismatch (lane-density fallback)"

    # General right-aligned broadcast (hidden-dim bias on a [B, S, D] activation).
    x3 = jax.random.normal(kx3, (2, 8, 32), dtype=jnp.float32)
    b3 = jax.random.normal(kb3, (32,), dtype=jnp.float32)
    out3 = jax.block_until_ready(bias_forward(x3, b3))
    assert jnp.allclose(out3, x3 + b3, atol=1e-6, rtol=1e-6), "mismatch (trailing-dim bias)"

    # Multi-step grid with partial (masked) tail blocks: force a 128-lane column tile over 245 cols.
    x4 = x2.reshape(3, 5 * 7 * 7)
    b4 = jnp.broadcast_to(b2.reshape(5, 1), (5, 49)).reshape(1, 245)
    out4 = jax.block_until_ready(_bias_add_2d(x4, b4, bias_is_row=True, tiles=(3, 128)))
    assert jnp.allclose(out4, x4 + b4, atol=1e-6, rtol=1e-6), "mismatch (partial tiles)"

    print("KERNEL_OK")
</pallas_src>

<mosaic_0001>
module attributes {stable_mosaic.version = 11 : i64} {
  func.func @_bias_add_kernel(%arg0: i32, %arg1: i32, %arg2: memref<8x256xf32, #tpu.memory_space<vmem>>, %arg3: memref<8x1xf32, #tpu.memory_space<vmem>>, %arg4: memref<8x256xf32, #tpu.memory_space<vmem>>) attributes {dimension_semantics = [#tpu.dimension_semantics<parallel>, #tpu.dimension_semantics<parallel>], iteration_bounds = array<i64: 1, 1>, scalar_prefetch = 0 : i64, scratch_operands = 0 : i64, tpu.core_type = #tpu.core_type<tc>, window_params = [{transform_indices = @transform_0, window_bounds = array<i64: 8, 256>}, {transform_indices = @transform_1, window_bounds = array<i64: 8, 1>}, {transform_indices = @transform_2, window_bounds = array<i64: 8, 256>}]} {
    %c0 = arith.constant 0 : index
    %c0_0 = arith.constant 0 : index
    %0 = vector.load %arg2[%c0, %c0_0] : memref<8x256xf32, #tpu.memory_space<vmem>>, vector<8x256xf32>
    %c0_1 = arith.constant 0 : index
    %c0_2 = arith.constant 0 : index
    %1 = vector.load %arg3[%c0_1, %c0_2] : memref<8x1xf32, #tpu.memory_space<vmem>>, vector<8x1xf32>
    %2 = vector.broadcast %1 : vector<8x1xf32> to vector<8x256xf32>
    %3 = arith.addf %0, %2 : vector<8x256xf32>
    %c0_3 = arith.constant 0 : index
    %c0_4 = arith.constant 0 : index
    %4 = vector.load %arg4[%c0_3, %c0_4] : memref<8x256xf32, #tpu.memory_space<vmem>>, vector<8x256xf32>
    tpu.vector_store %arg4[%c0_3, %c0_4], %3 {strides = array<i32>} : memref<8x256xf32, #tpu.memory_space<vmem>>, vector<8x256xf32>,
    return
  }
  func.func @transform_0(%arg0: i32, %arg1: i32) -> (i32, i32) {
    %c0_i32 = arith.constant 0 : i32
    return %arg0, %arg1 : i32, i32
  }
  func.func @transform_1(%arg0: i32, %arg1: i32) -> (i32, i32) {
    %c0_i32 = arith.constant 0 : i32
    %c0_i32_0 = arith.constant 0 : i32
    return %arg0, %c0_i32 : i32, i32
  }
  func.func @transform_2(%arg0: i32, %arg1: i32) -> (i32, i32) {
    %c0_i32 = arith.constant 0 : i32
    return %arg0, %arg1 : i32, i32
  }
}

</mosaic_0001>

<llo_original>
// kernel: tpu_custom_call.1
$region0: #{tpu_custom_call.1}
  #allocation0 [shape = 'u32[]', space=smem, size = 0x4, offset = 0x4, fixed_abs, tag = 'smem constant byte address 0x4 - core index']
  #allocation1 [shape = 'u32[144,128]{1,0:T(1,128)}', space=vmem, size = 0x12000, scoped, tag = 'internal scratch']
  %s0 = inlined_call_operand.hbm [shape: f32[8,256], index: 0, kind: input, shape index: {}]
  %s1 = inlined_call_operand.vmem [shape: f32[8,1], index: 1, kind: input, shape index: {}]
  %s2 = inlined_call_operand.hbm [shape: f32[8,256], index: 2, kind: output, shape index: {}]
  %s3 = sld [smem:[#allocation0]]
  $region22: #{tpu_custom_call.1} parent=0
    _
  %s5 = ssub.s32 1, %s3
  %s6 = scalar_select 0, %s5, %s3
  $region1: #{tpu_custom_call.1} parent=0
    #allocation2 [shape = 'u8[8192]{0}', space=vmem, size = 0x2000, scoped, tag = 'input window, operand 0, single buffered']
    #allocation3 [shape = 's32[1]{0}', space=sflag, size = 0x4, scoped, tag = 'scoped memory for tpu_custom_call.1']
    #allocation4 [shape = 's32[1]{0}', space=sflag, size = 0x4, scoped, tag = 'scoped memory for tpu_custom_call.1']
    #allocation5 [shape = 'u8[8192]{0}', space=vmem, size = 0x2000, scoped, tag = 'output window, operand 0, single buffered']
    %7 = vsyncpa [#allocation3], 0
    %8 = vsyncpa [#allocation4], 0
    // Predicated region
    $region2: #{tpu_custom_call.1} parent=1 // pred_check
      _
    $region3: #{tpu_custom_call.1} parent=1 // pred_check_branch
      %10 = sbr.rel (0) target = $region5
    $region4: #{tpu_custom_call.1} parent=1 // pred_region
      %s12 = ssub.s32 256, 256
      %13 = vsyncadd [#allocation3], %s12
      %s15 = sshll.u32 [#allocation2], 4
      %s16 = int_to_ptr.vmem [resolvable:$true] %s15
      %18 = dma.hbm_to_vmem [thread:$0]  %s0, 256, %s16, [#allocation3]
    $region5: #{tpu_custom_call.1} parent=1 // pred_fallthru
      _
    // Predicated region
    $region6: #{tpu_custom_call.1} parent=1 // pred_check
      _
    $region7: #{tpu_custom_call.1} parent=1 // pred_check_branch
      %20 = sbr.rel (0) target = $region9
    $region8: #{tpu_custom_call.1} parent=1 // pred_region
      _
    $region9: #{tpu_custom_call.1} parent=1 // pred_fallthru
      _
    // Predicated region
    $region10: #{tpu_custom_call.1} parent=1 // pred_check
      _
    $region11: #{tpu_custom_call.1} parent=1 // pred_check_branch
      %22 = sbr.rel (0) target = $region13
    $region12: #{tpu_custom_call.1} parent=1 // pred_region
      %23 = dma.done [#allocation3], 256
    $region13: #{tpu_custom_call.1} parent=1 // pred_fallthru
      _
    %v24 = vld [vmem:[#allocation2] sm:$0xff]
    %v25 = vld [vmem:[#allocation2 + $0x8] sm:$0xff]
    %v26 = vld [vmem:[%s1] sm:$0xff]
    %28 = vset.pattern.permute.xlu0 0
    %29 = vperm.xlu0 %28, %v26
    %v30 = vpop.permute.xlu0 %29
    %v32 = vadd.f32 %v24, %v30
    %v33 = vadd.f32 %v25, %v30
    %34 = vst [vmem:[#allocation5] sm:$0xff] %v32
    %35 = vst [vmem:[#allocation5 + $0x8] sm:$0xff] %v33
    // Predicated region
    $region14: #{tpu_custom_call.1} parent=1 // pred_check
      _
    $region15: #{tpu_custom_call.1} parent=1 // pred_check_branch
      %37 = sbr.rel (0) target = $region17
    $region16: #{tpu_custom_call.1} parent=1 // pred_region
      %s39 = ssub.s32 256, 256
      %40 = vsyncadd [#allocation4], %s39
      %s42 = sshll.u32 [#allocation5], 4
      %s43 = int_to_ptr.vmem [resolvable:$true] %s42
      %45 = dma.vmem_to_hbm [thread:$0]  %s43, 256, %s2, [#allocation4]
    $region17: #{tpu_custom_call.1} parent=1 // pred_fallthru
      _
    // Predicated region
    $region18: #{tpu_custom_call.1} parent=1 // pred_check
      _
    $region19: #{tpu_custom_call.1} parent=1 // pred_check_branch
      %47 = sbr.rel (0) target = $region21
    $region20: #{tpu_custom_call.1} parent=1 // pred_region
      %48 = dma.done [#allocation4], 256
    $region21: #{tpu_custom_call.1} parent=1 // pred_fallthru
      _
    %49 = vsyncpa [#allocation3], 1
    %50 = vsyncpa [#allocation4], 1

</llo_original>
